<compile_context>
chip_gen: v7x
topology: tpu7x:2x2x1
jax: 0.10.0
libtpu: 0.0.40
codegen_flags: <defaults>
</compile_context>

<pallas_src>
import jax
import jax.numpy as jnp
import numpy as np
from jax.experimental import pallas as pl
from jax.experimental.pallas import tpu as pltpu

B = 2         # batch
N = 128       # number of query tokens
D_MODEL = 64  # d_model
S = 62        # external memory size (module default S=62)


def _make_kernel(b, n, s, d):
    bn = b * n

    def kernel(q_ref, wk_ref, wv_ref, out_ref):
        # q_ref: (B*N, D) bf16, wk_ref: (D, S) bf16, wv_ref: (S, D) bf16.

        # attn = self.mk(queries): one 256-row MXU matmul for the whole batch.
        logits = jnp.dot(q_ref[...], wk_ref[...],
                         preferred_element_type=jnp.float32)          # (B*N, S) f32

        # Softmax over dim=1 (the token axis N, per batch).  Reshape only splits the
        # sublane axis at a multiple of 8, so it is layout-preserving (free).
        lg = logits.reshape(b, n, s)                                   # (B, N, S)
        m = jnp.max(lg, axis=1, keepdims=True)                         # (B, 1, S)
        e = jnp.exp(lg - m)                                            # f32 (v5e-safe)
        col_sum = jnp.sum(e, axis=1, keepdims=True)                    # (B, 1, S)
        p = (e * pl.reciprocal(col_sum, approx=True)).reshape(bn, s)   # softmax(dim=1)

        # Fold attn / attn.sum(dim=2) into the output instead of rescaling the
        # (B*N, S) matrix: out = (p @ Wv^T) / rowsum(p).
        r = jnp.sum(p, axis=1, keepdims=True)                          # (B*N, 1)
        out = jnp.dot(p.astype(wv_ref.dtype), wv_ref[...],
                      preferred_element_type=jnp.float32)              # (B*N, D) f32
        out_ref[...] = (out / r).astype(out_ref.dtype)                 # exact divide

    return kernel


def prepare_weights(wk, wv):
    """One-time weight prep (hoisted out of the per-call hot path).

    wk: mk.weight, shape (S, D_MODEL); wv: mv.weight, shape (D_MODEL, S).
    Returns Wk^T (D, S) and Wv^T (S, D) in bf16 MXU-feed layout/dtype.
    """
    wk_t = jnp.transpose(wk).astype(jnp.bfloat16)   # (D, S)
    wv_t = jnp.transpose(wv).astype(jnp.bfloat16)   # (S, D)
    return wk_t, wv_t


@jax.jit
def external_attention_forward(queries, wk_t, wv_t):
    """queries: (B, N, D) float32; wk_t: (D, S) bf16; wv_t: (S, D) bf16."""
    b, n, d = queries.shape
    s = wk_t.shape[1]
    bn = b * n

    q2d = queries.astype(jnp.bfloat16).reshape(bn, d)

    cost = pl.CostEstimate(
        flops=4 * b * n * s * d,                 # two (bn,d)x(d,s)-sized matmuls
        transcendentals=b * n * s,               # exp
        bytes_accessed=(q2d.size * 2 + wk_t.size * 2 + wv_t.size * 2 + bn * d * 4),
    )

    out2d = pl.pallas_call(
        _make_kernel(b, n, s, d),
        out_shape=jax.ShapeDtypeStruct((bn, d), jnp.float32),
        grid=(1,),                               # single step: whole batch at once
        in_specs=[
            pl.BlockSpec((bn, d), lambda i: (0, 0)),   # all queries, VMEM-resident
            pl.BlockSpec((d, s), lambda i: (0, 0)),    # Wk^T, resident
            pl.BlockSpec((s, d), lambda i: (0, 0)),    # Wv^T, resident
        ],
        out_specs=pl.BlockSpec((bn, d), lambda i: (0, 0)),
        compiler_params=pltpu.CompilerParams(dimension_semantics=("arbitrary",)),
        cost_estimate=cost,
    )(q2d, wk_t, wv_t)

    return out2d.reshape(b, n, d)


def reference_forward(queries, wk, wv):
    """Pure-JAX mirror of the PyTorch forward (f32 throughout)."""
    attn = jnp.einsum('bnd,sd->bns', queries, wk)                 # mk (no bias)
    attn = jax.nn.softmax(attn, axis=1)                           # Softmax(dim=1)
    attn = attn / jnp.sum(attn, axis=2, keepdims=True)            # renorm over S
    return jnp.einsum('bns,ds->bnd', attn, wv)                    # mv (no bias)


if __name__ == "__main__":
    key = jax.random.PRNGKey(0)
    kq, kk, kv = jax.random.split(key, 3)

    queries = jax.random.normal(kq, (B, N, D_MODEL), jnp.float32)
    # Module init is normal(std=0.001) with no bias; use a slightly larger std so the
    # numerical check is meaningful (forward semantics are init-independent).
    wk = 0.02 * jax.random.normal(kk, (S, D_MODEL), jnp.float32)      # mk.weight
    wv = 0.02 * jax.random.normal(kv, (D_MODEL, S), jnp.float32)      # mv.weight

    wk_t, wv_t = prepare_weights(wk, wv)     # hoisted one-time weight prep

    out = external_attention_forward(queries, wk_t, wv_t)
    out = jax.block_until_ready(out)

    ref = reference_forward(queries, wk, wv)
    assert out.shape == (B, N, D_MODEL)
    np.testing.assert_allclose(np.asarray(out), np.asarray(ref), rtol=2e-2, atol=5e-4)
    print("KERNEL_OK")
</pallas_src>

<mosaic_0001>
module attributes {stable_mosaic.version = 11 : i64} {
  func.func @kernel(%arg0: i32, %arg1: memref<256x64xbf16, #tpu.memory_space<vmem>>, %arg2: memref<64x62xbf16, #tpu.memory_space<vmem>>, %arg3: memref<62x64xbf16, #tpu.memory_space<vmem>>, %arg4: memref<256x64xf32, #tpu.memory_space<vmem>>) attributes {dimension_semantics = [#tpu.dimension_semantics<arbitrary>], iteration_bounds = array<i64: 1>, scalar_prefetch = 0 : i64, scratch_operands = 0 : i64, tpu.core_type = #tpu.core_type<tc>, window_params = [{pipeline_mode = #tpu.pipeline_mode<synchronous>, transform_indices = @transform_0, window_bounds = array<i64: 256, 64>}, {pipeline_mode = #tpu.pipeline_mode<synchronous>, transform_indices = @transform_1, window_bounds = array<i64: 64, 62>}, {pipeline_mode = #tpu.pipeline_mode<synchronous>, transform_indices = @transform_2, window_bounds = array<i64: 62, 64>}, {pipeline_mode = #tpu.pipeline_mode<synchronous>, transform_indices = @transform_3, window_bounds = array<i64: 256, 64>}]} {
    %c0 = arith.constant 0 : index
    %c0_0 = arith.constant 0 : index
    %0 = vector.load %arg1[%c0, %c0_0] : memref<256x64xbf16, #tpu.memory_space<vmem>>, vector<256x64xbf16>
    %c0_1 = arith.constant 0 : index
    %c0_2 = arith.constant 0 : index
    %1 = vector.load %arg2[%c0_1, %c0_2] : memref<64x62xbf16, #tpu.memory_space<vmem>>, vector<64x62xbf16>
    %cst = arith.constant dense<0.000000e+00> : vector<256x62xf32>
    %2 = tpu.matmul %0, %1, %cst {dimension_numbers = #tpu.dot_dimension_numbers<[1], [0], [0], [1], [0, 0, 1, 1], [], []>} : vector<256x64xbf16>, vector<64x62xbf16>, vector<256x62xf32> -> vector<256x62xf32>
    %3 = vector.shape_cast %2 : vector<256x62xf32> to vector<2x128x62xf32>
    %cst_3 = arith.constant dense<0xFF800000> : vector<2x62xf32>
    %4 = vector.multi_reduction <maximumf>, %3, %cst_3 [1] : vector<2x128x62xf32> to vector<2x62xf32>
    %5 = vector.shape_cast %4 : vector<2x62xf32> to vector<2x1x62xf32>
    %6 = vector.broadcast %5 : vector<2x1x62xf32> to vector<2x128x62xf32>
    %7 = arith.subf %3, %6 : vector<2x128x62xf32>
    %8 = math.exp %7 : vector<2x128x62xf32>
    %cst_4 = arith.constant dense<0.000000e+00> : vector<2x62xf32>
    %9 = vector.multi_reduction <add>, %8, %cst_4 [1] : vector<2x128x62xf32> to vector<2x62xf32>
    %10 = vector.shape_cast %9 : vector<2x62xf32> to vector<2x1x62xf32>
    %11 = tpu.reciprocal %10 {approx = true} : vector<2x1x62xf32> -> vector<2x1x62xf32>
    %12 = vector.broadcast %11 : vector<2x1x62xf32> to vector<2x128x62xf32>
    %13 = arith.mulf %8, %12 : vector<2x128x62xf32>
    %14 = vector.shape_cast %13 : vector<2x128x62xf32> to vector<256x62xf32>
    %cst_5 = arith.constant dense<0.000000e+00> : vector<256xf32>
    %15 = vector.multi_reduction <add>, %14, %cst_5 [1] : vector<256x62xf32> to vector<256xf32>
    %16 = vector.shape_cast %15 : vector<256xf32> to vector<256x1xf32>
    %17 = arith.truncf %14 : vector<256x62xf32> to vector<256x62xbf16>
    %c0_6 = arith.constant 0 : index
    %c0_7 = arith.constant 0 : index
    %18 = vector.load %arg3[%c0_6, %c0_7] : memref<62x64xbf16, #tpu.memory_space<vmem>>, vector<62x64xbf16>
    %cst_8 = arith.constant dense<0.000000e+00> : vector<256x64xf32>
    %19 = tpu.matmul %17, %18, %cst_8 {dimension_numbers = #tpu.dot_dimension_numbers<[1], [0], [0], [1], [0, 0, 1, 1], [], []>} : vector<256x62xbf16>, vector<62x64xbf16>, vector<256x64xf32> -> vector<256x64xf32>
    %20 = vector.broadcast %16 : vector<256x1xf32> to vector<256x64xf32>
    %21 = arith.divf %19, %20 : vector<256x64xf32>
    %c0_9 = arith.constant 0 : index
    %c0_10 = arith.constant 0 : index
    %22 = vector.load %arg4[%c0_9, %c0_10] : memref<256x64xf32, #tpu.memory_space<vmem>>, vector<256x64xf32>
    tpu.vector_store %arg4[%c0_9, %c0_10], %21 {strides = array<i32>} : memref<256x64xf32, #tpu.memory_space<vmem>>, vector<256x64xf32>,
    return
  }
  func.func @transform_0(%arg0: i32) -> (i32, i32) {
    %c0_i32 = arith.constant 0 : i32
    %c0_i32_0 = arith.constant 0 : i32
    %c0_i32_1 = arith.constant 0 : i32
    return %c0_i32, %c0_i32_0 : i32, i32
  }
  func.func @transform_1(%arg0: i32) -> (i32, i32) {
    %c0_i32 = arith.constant 0 : i32
    %c0_i32_0 = arith.constant 0 : i32
    %c0_i32_1 = arith.constant 0 : i32
    return %c0_i32, %c0_i32_0 : i32, i32
  }
  func.func @transform_2(%arg0: i32) -> (i32, i32) {
    %c0_i32 = arith.constant 0 : i32
    %c0_i32_0 = arith.constant 0 : i32
    %c0_i32_1 = arith.constant 0 : i32
    return %c0_i32, %c0_i32_0 : i32, i32
  }
  func.func @transform_3(%arg0: i32) -> (i32, i32) {
    %c0_i32 = arith.constant 0 : i32
    %c0_i32_0 = arith.constant 0 : i32
    %c0_i32_1 = arith.constant 0 : i32
    return %c0_i32, %c0_i32_0 : i32, i32
  }
}

</mosaic_0001>

<llo_original>
// kernel: external_attention_forward.1
$region0: #{external_attention_forward.1}
  #allocation0 [shape = 'u32[]', space=smem, size = 0x4, offset = 0x4, fixed_abs, tag = 'smem constant byte address 0x4 - core index']
  #allocation1 [shape = 'u32[144,128]{1,0:T(1,128)}', space=vmem, size = 0x12000, scoped, tag = 'internal scratch']
  %s0 = inlined_call_operand.vmem [shape: bf16[256,64], index: 0, kind: input, shape index: {}]
  %s1 = inlined_call_operand.vmem [shape: bf16[64,62], index: 1, kind: input, shape index: {}]
  %s2 = inlined_call_operand.vmem [shape: bf16[62,64], index: 2, kind: input, shape index: {}]
  %s3 = inlined_call_operand.vmem [shape: f32[256,64], index: 3, kind: output, shape index: {}]
  %s4 = sld [smem:[#allocation0]]
  $region22: #{external_attention_forward.1} parent=0
    _
  %s6 = ssub.s32 1, %s4
  %s7 = scalar_select 0, %s6, %s4
  // Predicated region
  $region2: #{external_attention_forward.1} parent=0 // pred_check
    _
  $region3: #{external_attention_forward.1} parent=0 // pred_check_branch
    %9 = sbr.rel (0) target = $region5
  $region4: #{external_attention_forward.1} parent=0 // pred_region
    _
  $region5: #{external_attention_forward.1} parent=0 // pred_fallthru
    _
  // Predicated region
  $region6: #{external_attention_forward.1} parent=0 // pred_check
    _
  $region7: #{external_attention_forward.1} parent=0 // pred_check_branch
    %11 = sbr.rel (0) target = $region9
  $region8: #{external_attention_forward.1} parent=0 // pred_region
    _
  $region9: #{external_attention_forward.1} parent=0 // pred_fallthru
    _
  // Predicated region
  $region10: #{external_attention_forward.1} parent=0 // pred_check
    _
  $region11: #{external_attention_forward.1} parent=0 // pred_check_branch
    %13 = sbr.rel (0) target = $region13
  $region12: #{external_attention_forward.1} parent=0 // pred_region
    _
  $region13: #{external_attention_forward.1} parent=0 // pred_fallthru
    _
  %v15 = vld [vmem:[%s0] sm:$0xf]
  %v16 = vld [vmem:[%s0 + $0x4] sm:$0xf]
  %v17 = vld [vmem:[%s0 + $0x8] sm:$0xf]
  %v18 = vld [vmem:[%s0 + $0xc] sm:$0xf]
  %v19 = vld [vmem:[%s0 + $0x10] sm:$0xf]
  %v20 = vld [vmem:[%s0 + $0x14] sm:$0xf]
  %v21 = vld [vmem:[%s0 + $0x18] sm:$0xf]
  %v22 = vld [vmem:[%s0 + $0x1c] sm:$0xf]
  %v23 = vld [vmem:[%s0 + $0x20] sm:$0xf]
  %v24 = vld [vmem:[%s0 + $0x24] sm:$0xf]
  %v25 = vld [vmem:[%s0 + $0x28] sm:$0xf]
  %v26 = vld [vmem:[%s0 + $0x2c] sm:$0xf]
  %v27 = vld [vmem:[%s0 + $0x30] sm:$0xf]
  %v28 = vld [vmem:[%s0 + $0x34] sm:$0xf]
  %v29 = vld [vmem:[%s0 + $0x38] sm:$0xf]
  %v30 = vld [vmem:[%s0 + $0x3c] sm:$0xf]
  %v31 = vld [vmem:[%s0 + $0x40] sm:$0xf]
  %v32 = vld [vmem:[%s0 + $0x44] sm:$0xf]
  %v33 = vld [vmem:[%s0 + $0x48] sm:$0xf]
  %v34 = vld [vmem:[%s0 + $0x4c] sm:$0xf]
  %v35 = vld [vmem:[%s0 + $0x50] sm:$0xf]
  %v36 = vld [vmem:[%s0 + $0x54] sm:$0xf]
  %v37 = vld [vmem:[%s0 + $0x58] sm:$0xf]
  %v38 = vld [vmem:[%s0 + $0x5c] sm:$0xf]
  %v39 = vld [vmem:[%s0 + $0x60] sm:$0xf]
  %v40 = vld [vmem:[%s0 + $0x64] sm:$0xf]
  %v41 = vld [vmem:[%s0 + $0x68] sm:$0xf]
  %v42 = vld [vmem:[%s0 + $0x6c] sm:$0xf]
  %v43 = vld [vmem:[%s0 + $0x70] sm:$0xf]
  %v44 = vld [vmem:[%s0 + $0x74] sm:$0xf]
  %v45 = vld [vmem:[%s0 + $0x78] sm:$0xf]
  %v46 = vld [vmem:[%s0 + $0x7c] sm:$0xf]
  %v47 = vld [vmem:[%s1] sm:$0xf]
  %v48 = vld [vmem:[%s1 + $0x4] sm:$0xf]
  %v49 = vld [vmem:[%s1 + $0x8] sm:$0xf]
  %v50 = vld [vmem:[%s1 + $0xc] sm:$0xf]
  %v51 = vld [vmem:[%s1 + $0x10] sm:$0xf]
  %v52 = vld [vmem:[%s1 + $0x14] sm:$0xf]
  %v53 = vld [vmem:[%s1 + $0x18] sm:$0xf]
  %v54 = vld [vmem:[%s1 + $0x1c] sm:$0xf]
  %v87 = vunpack.c.l.b16 %v15
  %v88 = vunpack.c.l.b16 %v16
  %v89 = vunpack.c.l.b16 %v17
  %v90 = vunpack.c.l.b16 %v18
  %v91 = vunpack.c.l.b16 %v19
  %v92 = vunpack.c.l.b16 %v20
  %v93 = vunpack.c.l.b16 %v21
  %v94 = vunpack.c.l.b16 %v22
  %v95 = vunpack.c.l.b16 %v23
  %v96 = vunpack.c.l.b16 %v24
  %v97 = vunpack.c.l.b16 %v25
  %v98 = vunpack.c.l.b16 %v26
  %v99 = vunpack.c.l.b16 %v27
  %v100 = vunpack.c.l.b16 %v28
  %v101 = vunpack.c.l.b16 %v29
  %v102 = vunpack.c.l.b16 %v30
  %v103 = vunpack.c.l.b16 %v31
  %v104 = vunpack.c.l.b16 %v32
  %v105 = vunpack.c.l.b16 %v33
  %v106 = vunpack.c.l.b16 %v34
  %v107 = vunpack.c.l.b16 %v35
  %v108 = vunpack.c.l.b16 %v36
  %v109 = vunpack.c.l.b16 %v37
  %v110 = vunpack.c.l.b16 %v38
  %v111 = vunpack.c.l.b16 %v39
  %v112 = vunpack.c.l.b16 %v40
  %v113 = vunpack.c.l.b16 %v41
  %v114 = vunpack.c.l.b16 %v42
  %v115 = vunpack.c.l.b16 %v43
  %v116 = vunpack.c.l.b16 %v44
  %v117 = vunpack.c.l.b16 %v45
  %v118 = vunpack.c.l.b16 %v46
  %v119 = vpack.c.b16 %v88, %v87
  %v120 = vpack.c.b16 %v90, %v89
  %v121 = vpack.c.b16 %v92, %v91
  %v122 = vpack.c.b16 %v94, %v93
  %v123 = vpack.c.b16 %v96, %v95
  %v124 = vpack.c.b16 %v98, %v97
  %v125 = vpack.c.b16 %v100, %v99
  %v126 = vpack.c.b16 %v102, %v101
  %v127 = vpack.c.b16 %v104, %v103
  %v128 = vpack.c.b16 %v106, %v105
  %v129 = vpack.c.b16 %v108, %v107
  %v130 = vpack.c.b16 %v110, %v109
  %v131 = vpack.c.b16 %v112, %v111
  %v132 = vpack.c.b16 %v114, %v113
  %v133 = vpack.c.b16 %v116, %v115
  %v134 = vpack.c.b16 %v118, %v117
  %v143 = vunpack.c.l.b16 %v47
  %v144 = vunpack.c.l.b16 %v48
  %v145 = vunpack.c.l.b16 %v49
  %v146 = vunpack.c.l.b16 %v50
  %v147 = vunpack.c.l.b16 %v51
  %v148 = vunpack.c.l.b16 %v52
  %v149 = vunpack.c.l.b16 %v53
  %v150 = vunpack.c.l.b16 %v54
  %v151 = vpack.c.b16 %v144, %v143
  %v152 = vpack.c.b16 %v146, %v145
  %v153 = vpack.c.b16 %v148, %v147
  %v154 = vpack.c.b16 %v150, %v149
  %vm159 = vcmask 523264
  %v161 = vsel %vm159, %v119, 0
  %v164 = vsel %vm159, %v120, 0
  %v167 = vsel %vm159, %v121, 0
  %v170 = vsel %vm159, %v122, 0
  %v173 = vsel %vm159, %v123, 0
  %v176 = vsel %vm159, %v124, 0
  %v179 = vsel %vm159, %v125, 0
  %v182 = vsel %vm159, %v126, 0
  %v185 = vsel %vm159, %v127, 0
  %v188 = vsel %vm159, %v128, 0
  %v191 = vsel %vm159, %v129, 0
  %v194 = vsel %vm159, %v130, 0
  %v197 = vsel %vm159, %v131, 0
  %v200 = vsel %vm159, %v132, 0
  %v203 = vsel %vm159, %v133, 0
  %v206 = vsel %vm159, %v134, 0
  %208 = vmatprep.subr.bf16.mxu0 0
  %209 = vmatpush1.bf16.msra.mxu0 %v151
  %210 = vmatprep.subr.bf16.mxu0 0
  %211 = vmatpush1.bf16.msra.mxu0 %v152
  %212 = vmatprep.subr.bf16.mxu0 0
  %213 = vmatpush1.bf16.msra.mxu0 %v153
  %214 = vmatprep.subr.bf16.mxu0 0
  %215 = vmatpush1.bf16.msra.mxu0 %v154
  %216 = vmatprep.subr.bf16.mxu0 0
  %217 = vmatpush1.bf16.msra.mxu0 0
  %218 = vmatprep.subr.bf16.mxu0 0
  %219 = vmatpush1.bf16.msra.mxu0 0
  %220 = vmatprep.subr.bf16.mxu0 0
  %221 = vmatpush1.bf16.msra.mxu0 0
  %222 = vmatprep.subr.bf16.mxu0 0
  %223 = vmatpush1.bf16.msra.mxu0 0
  %224 = vmatprep.subr.bf16.mxu0 0
  %225 = vmatpush1.bf16.msra.mxu0 0
  %226 = vmatprep.subr.bf16.mxu0 0
  %227 = vmatpush1.bf16.msra.mxu0 0
  %228 = vmatprep.subr.bf16.mxu0 0
  %229 = vmatpush1.bf16.msra.mxu0 0
  %230 = vmatprep.subr.bf16.mxu0 0
  %231 = vmatpush1.bf16.msra.mxu0 0
  %232 = vmatprep.subr.bf16.mxu0 0
  %233 = vmatpush1.bf16.msra.mxu0 0
  %234 = vmatprep.subr.bf16.mxu0 0
  %235 = vmatpush1.bf16.msra.mxu0 0
  %236 = vmatprep.subr.bf16.mxu0 0
  %237 = vmatpush1.bf16.msra.mxu0 0
  %238 = vmatprep.subr.bf16.mxu0 0
  %239 = vmatpush1.bf16.msra.mxu0 0
  %240 = vmatprep.mubr.bf16.mxu0 0
  %241 = vmatmul.mubr.bf16.gmra.mrb[0].mxu0 %v161
  %v242 = vpop.f32.mrb[0].mxu0
  %v243 = vadd.f32 0.0, %v242
  %v244 = vpop.f32.mrb[0].mxu0
  %v245 = vpop.f32.mrb[0].mxu0
  %v246 = vadd.f32 0.0, %v245
  %v247 = vpop.f32.mrb[0].mxu0
  %248 = vmatprep.mubr.bf16.mxu0 0
  %249 = vmatmul.mubr.bf16.gmra.mrb[0].mxu0 %v164
  %v250 = vpop.f32.mrb[0].mxu0
  %v251 = vadd.f32 0.0, %v250
  %v252 = vpop.f32.mrb[0].mxu0
  %v253 = vpop.f32.mrb[0].mxu0
  %v254 = vadd.f32 0.0, %v253
  %v255 = vpop.f32.mrb[0].mxu0
  %256 = vmatprep.mubr.bf16.mxu0 0
  %257 = vmatmul.mubr.bf16.gmra.mrb[0].mxu0 %v167
  %v258 = vpop.f32.mrb[0].mxu0
  %v259 = vadd.f32 0.0, %v258
  %v260 = vpop.f32.mrb[0].mxu0
  %v261 = vpop.f32.mrb[0].mxu0
  %v262 = vadd.f32 0.0, %v261
  %v263 = vpop.f32.mrb[0].mxu0
  %264 = vmatprep.mubr.bf16.mxu0 0
  %265 = vmatmul.mubr.bf16.gmra.mrb[0].mxu0 %v170
  %v266 = vpop.f32.mrb[0].mxu0
  %v267 = vadd.f32 0.0, %v266
  %v268 = vpop.f32.mrb[0].mxu0
  %v269 = vpop.f32.mrb[0].mxu0
  %v270 = vadd.f32 0.0, %v269
  %v271 = vpop.f32.mrb[0].mxu0
  %272 = vmatprep.mubr.bf16.mxu0 0
  %273 = vmatmul.mubr.bf16.gmra.mrb[0].mxu0 %v173
  %v274 = vpop.f32.mrb[0].mxu0
  %v275 = vadd.f32 0.0, %v274
  %v276 = vpop.f32.mrb[0].mxu0
  %v277 = vpop.f32.mrb[0].mxu0
  %v278 = vadd.f32 0.0, %v277
  %v279 = vpop.f32.mrb[0].mxu0
  %280 = vmatprep.mubr.bf16.mxu0 0
  %281 = vmatmul.mubr.bf16.gmra.mrb[0].mxu0 %v176
  %v282 = vpop.f32.mrb[0].mxu0
  %v283 = vadd.f32 0.0, %v282
  %v284 = vpop.f32.mrb[0].mxu0
  %v285 = vpop.f32.mrb[0].mxu0
  %v286 = vadd.f32 0.0, %v285
  %v287 = vpop.f32.mrb[0].mxu0
  %288 = vmatprep.mubr.bf16.mxu0 0
  %289 = vmatmul.mubr.bf16.gmra.mrb[0].mxu0 %v179
  %v290 = vpop.f32.mrb[0].mxu0
  %v291 = vadd.f32 0.0, %v290
  %v292 = vpop.f32.mrb[0].mxu0
  %v293 = vpop.f32.mrb[0].mxu0
  %v294 = vadd.f32 0.0, %v293
  %v295 = vpop.f32.mrb[0].mxu0
  %296 = vmatprep.mubr.bf16.mxu0 0
  %297 = vmatmul.mubr.bf16.gmra.mrb[0].mxu0 %v182
  %v298 = vpop.f32.mrb[0].mxu0
  %v299 = vadd.f32 0.0, %v298
  %v300 = vpop.f32.mrb[0].mxu0
  %v301 = vpop.f32.mrb[0].mxu0
  %v302 = vadd.f32 0.0, %v301
  %v303 = vpop.f32.mrb[0].mxu0
  %304 = vmatprep.mubr.bf16.mxu0 0
  %305 = vmatmul.mubr.bf16.gmra.mrb[0].mxu0 %v185
  %v306 = vpop.f32.mrb[0].mxu0
  %v307 = vadd.f32 0.0, %v306
  %v308 = vpop.f32.mrb[0].mxu0
  %v309 = vpop.f32.mrb[0].mxu0
  %v310 = vadd.f32 0.0, %v309
  %v311 = vpop.f32.mrb[0].mxu0
  %312 = vmatprep.mubr.bf16.mxu0 0
  %313 = vmatmul.mubr.bf16.gmra.mrb[0].mxu0 %v188
  %v314 = vpop.f32.mrb[0].mxu0
  %v315 = vadd.f32 0.0, %v314
  %v316 = vpop.f32.mrb[0].mxu0
  %v317 = vpop.f32.mrb[0].mxu0
  %v318 = vadd.f32 0.0, %v317
  %v319 = vpop.f32.mrb[0].mxu0
  %320 = vmatprep.mubr.bf16.mxu0 0
  %321 = vmatmul.mubr.bf16.gmra.mrb[0].mxu0 %v191
  %v322 = vpop.f32.mrb[0].mxu0
  %v323 = vadd.f32 0.0, %v322
  %v324 = vpop.f32.mrb[0].mxu0
  %v325 = vpop.f32.mrb[0].mxu0
  %v326 = vadd.f32 0.0, %v325
  %v327 = vpop.f32.mrb[0].mxu0
  %328 = vmatprep.mubr.bf16.mxu0 0
  %329 = vmatmul.mubr.bf16.gmra.mrb[0].mxu0 %v194
  %v330 = vpop.f32.mrb[0].mxu0
  %v331 = vadd.f32 0.0, %v330
  %v332 = vpop.f32.mrb[0].mxu0
  %v333 = vpop.f32.mrb[0].mxu0
  %v334 = vadd.f32 0.0, %v333
  %v335 = vpop.f32.mrb[0].mxu0
  %336 = vmatprep.mubr.bf16.mxu0 0
  %337 = vmatmul.mubr.bf16.gmra.mrb[0].mxu0 %v197
  %v338 = vpop.f32.mrb[0].mxu0
  %v339 = vadd.f32 0.0, %v338
  %v340 = vpop.f32.mrb[0].mxu0
  %v341 = vpop.f32.mrb[0].mxu0
  %v342 = vadd.f32 0.0, %v341
  %v343 = vpop.f32.mrb[0].mxu0
  %344 = vmatprep.mubr.bf16.mxu0 0
  %345 = vmatmul.mubr.bf16.gmra.mrb[0].mxu0 %v200
  %v346 = vpop.f32.mrb[0].mxu0
  %v347 = vadd.f32 0.0, %v346
  %v348 = vpop.f32.mrb[0].mxu0
  %v349 = vpop.f32.mrb[0].mxu0
  %v350 = vadd.f32 0.0, %v349
  %v351 = vpop.f32.mrb[0].mxu0
  %352 = vmatprep.mubr.bf16.mxu0 0
  %353 = vmatmul.mubr.bf16.gmra.mrb[0].mxu0 %v203
  %v354 = vpop.f32.mrb[0].mxu0
  %v355 = vadd.f32 0.0, %v354
  %v356 = vpop.f32.mrb[0].mxu0
  %v357 = vpop.f32.mrb[0].mxu0
  %v358 = vadd.f32 0.0, %v357
  %v359 = vpop.f32.mrb[0].mxu0
  %360 = vmatprep.mubr.bf16.mxu0 0
  %361 = vmatmul.mubr.bf16.gmra.mrb[0].mxu0 %v206
  %v362 = vpop.f32.mrb[0].mxu0
  %v363 = vadd.f32 0.0, %v362
  %v364 = vpop.f32.mrb[0].mxu0
  %v365 = vpop.f32.mrb[0].mxu0
  %v366 = vadd.f32 0.0, %v365
  %v367 = vpop.f32.mrb[0].mxu0
  %368 = vdwg.mxu0
  %vm369 = vcmask 506880
  %v370 = vsel %vm369, %v243, -inf
  %v371 = vsel %vm369, %v246, -inf
  %v372 = vsel %vm369, %v251, -inf
  %v373 = vmax.f32 %v370, %v372
  %v374 = vsel %vm369, %v254, -inf
  %v375 = vmax.f32 %v371, %v374
  %v376 = vsel %vm369, %v259, -inf
  %v377 = vmax.f32 %v373, %v376
  %v378 = vsel %vm369, %v262, -inf
  %v379 = vmax.f32 %v375, %v378
  %v380 = vsel %vm369, %v267, -inf
  %v381 = vmax.f32 %v377, %v380
  %v382 = vsel %vm369, %v270, -inf
  %v383 = vmax.f32 %v379, %v382
  %v384 = vsel %vm369, %v275, -inf
  %v385 = vmax.f32 %v381, %v384
  %v386 = vsel %vm369, %v278, -inf
  %v387 = vmax.f32 %v383, %v386
  %v388 = vsel %vm369, %v283, -inf
  %v389 = vmax.f32 %v385, %v388
  %v390 = vsel %vm369, %v286, -inf
  %v391 = vmax.f32 %v387, %v390
  %v392 = vsel %vm369, %v291, -inf
  %v393 = vmax.f32 %v389, %v392
  %v394 = vsel %vm369, %v294, -inf
  %v395 = vmax.f32 %v391, %v394
  %v396 = vsel %vm369, %v299, -inf
  %v397 = vmax.f32 %v393, %v396
  %v398 = vsel %vm369, %v302, -inf
  %v399 = vmax.f32 %v395, %v398
  %v400 = vmax.f32 %v397, %v399
  %v401 = vrot.slane %v400, 4
  %v402 = vmax.f32 %v400, %v401
  %v403 = vrot.slane %v402, 2
  %v404 = vmax.f32 %v402, %v403
  %v405 = vrot.slane %v404, 1
  %v406 = vmax.f32 %v404, %v405
  %v407 = vsel %vm369, %v307, -inf
  %v408 = vsel %vm369, %v310, -inf
  %v409 = vsel %vm369, %v315, -inf
  %v410 = vmax.f32 %v407, %v409
  %v411 = vsel %vm369, %v318, -inf
  %v412 = vmax.f32 %v408, %v411
  %v413 = vsel %vm369, %v323, -inf
  %v414 = vmax.f32 %v410, %v413
  %v415 = vsel %vm369, %v326, -inf
  %v416 = vmax.f32 %v412, %v415
  %v417 = vsel %vm369, %v331, -inf
  %v418 = vmax.f32 %v414, %v417
  %v419 = vsel %vm369, %v334, -inf
  %v420 = vmax.f32 %v416, %v419
  %v421 = vsel %vm369, %v339, -inf
  %v422 = vmax.f32 %v418, %v421
  %v423 = vsel %vm369, %v342, -inf
  %v424 = vmax.f32 %v420, %v423
  %v425 = vsel %vm369, %v347, -inf
  %v426 = vmax.f32 %v422, %v425
  %v427 = vsel %vm369, %v350, -inf
  %v428 = vmax.f32 %v424, %v427
  %v429 = vsel %vm369, %v355, -inf
  %v430 = vmax.f32 %v426, %v429
  %v431 = vsel %vm369, %v358, -inf
  %v432 = vmax.f32 %v428, %v431
  %v433 = vsel %vm369, %v363, -inf
  %v434 = vmax.f32 %v430, %v433
  %v435 = vsel %vm369, %v366, -inf
  %v436 = vmax.f32 %v432, %v435
  %v437 = vmax.f32 %v434, %v436
  %v438 = vrot.slane %v437, 4
  %v439 = vmax.f32 %v437, %v438
  %v440 = vrot.slane %v439, 2
  %v441 = vmax.f32 %v439, %v440
  %v442 = vrot.slane %v441, 1
  %v443 = vmax.f32 %v441, %v442
  %v444 = vsub.f32 %v243, %v406
  %v445 = vsub.f32 %v246, %v406
  %v446 = vsub.f32 %v251, %v406
  %v447 = vsub.f32 %v254, %v406
  %v448 = vsub.f32 %v259, %v406
  %v449 = vsub.f32 %v262, %v406
  %v450 = vsub.f32 %v267, %v406
  %v451 = vsub.f32 %v270, %v406
  %v452 = vsub.f32 %v275, %v406
  %v453 = vsub.f32 %v278, %v406
  %v454 = vsub.f32 %v283, %v406
  %v455 = vsub.f32 %v286, %v406
  %v456 = vsub.f32 %v291, %v406
  %v457 = vsub.f32 %v294, %v406
  %v458 = vsub.f32 %v299, %v406
  %v459 = vsub.f32 %v302, %v406
  %v460 = vsub.f32 %v307, %v443
  %v461 = vsub.f32 %v310, %v443
  %v462 = vsub.f32 %v315, %v443
  %v463 = vsub.f32 %v318, %v443
  %v464 = vsub.f32 %v323, %v443
  %v465 = vsub.f32 %v326, %v443
  %v466 = vsub.f32 %v331, %v443
  %v467 = vsub.f32 %v334, %v443
  %v468 = vsub.f32 %v339, %v443
  %v469 = vsub.f32 %v342, %v443
  %v470 = vsub.f32 %v347, %v443
  %v471 = vsub.f32 %v350, %v443
  %v472 = vsub.f32 %v355, %v443
  %v473 = vsub.f32 %v358, %v443
  %v474 = vsub.f32 %v363, %v443
  %v475 = vsub.f32 %v366, %v443
  %v476 = vmul.f32 %v444, 1.442695
  %v477 = vpow.pop %v476
  %v478 = vmul.f32 %v445, 1.442695
  %v479 = vpow.pop %v478
  %v480 = vmul.f32 %v446, 1.442695
  %v481 = vpow.pop %v480
  %v482 = vmul.f32 %v447, 1.442695
  %v483 = vpow.pop %v482
  %v484 = vmul.f32 %v448, 1.442695
  %v485 = vpow.pop %v484
  %v486 = vmul.f32 %v449, 1.442695
  %v487 = vpow.pop %v486
  %v488 = vmul.f32 %v450, 1.442695
  %v489 = vpow.pop %v488
  %v490 = vmul.f32 %v451, 1.442695
  %v491 = vpow.pop %v490
  %v492 = vmul.f32 %v452, 1.442695
  %v493 = vpow.pop %v492
  %v494 = vmul.f32 %v453, 1.442695
  %v495 = vpow.pop %v494
  %v496 = vmul.f32 %v454, 1.442695
  %v497 = vpow.pop %v496
  %v498 = vmul.f32 %v455, 1.442695
  %v499 = vpow.pop %v498
  %v500 = vmul.f32 %v456, 1.442695
  %v501 = vpow.pop %v500
  %v502 = vmul.f32 %v457, 1.442695
  %v503 = vpow.pop %v502
  %v504 = vmul.f32 %v458, 1.442695
  %v505 = vpow.pop %v504
  %v506 = vmul.f32 %v459, 1.442695
  %v507 = vpow.pop %v506
  %v508 = vmul.f32 %v460, 1.442695
  %v509 = vpow.pop %v508
  %v510 = vmul.f32 %v461, 1.442695
  %v511 = vpow.pop %v510
  %v512 = vmul.f32 %v462, 1.442695
  %v513 = vpow.pop %v512
  %v514 = vmul.f32 %v463, 1.442695
  %v515 = vpow.pop %v514
  %v516 = vmul.f32 %v464, 1.442695
  %v517 = vpow.pop %v516
  %v518 = vmul.f32 %v465, 1.442695
  %v519 = vpow.pop %v518
  %v520 = vmul.f32 %v466, 1.442695
  %v521 = vpow.pop %v520
  %v522 = vmul.f32 %v467, 1.442695
  %v523 = vpow.pop %v522
  %v524 = vmul.f32 %v468, 1.442695
  %v525 = vpow.pop %v524
  %v526 = vmul.f32 %v469, 1.442695
  %v527 = vpow.pop %v526
  %v528 = vmul.f32 %v470, 1.442695
  %v529 = vpow.pop %v528
  %v530 = vmul.f32 %v471, 1.442695
  %v531 = vpow.pop %v530
  %v532 = vmul.f32 %v472, 1.442695
  %v533 = vpow.pop %v532
  %v534 = vmul.f32 %v473, 1.442695
  %v535 = vpow.pop %v534
  %v536 = vmul.f32 %v474, 1.442695
  %v537 = vpow.pop %v536
  %v538 = vmul.f32 %v475, 1.442695
  %v539 = vpow.pop %v538
  %v540 = vsel %vm369, %v477, 0.0
  %v541 = vsel %vm369, %v479, 0.0
  %v542 = vadd.f32 %v540, %v541
  %v543 = vsel %vm369, %v481, 0.0
  %v544 = vadd.f32 %v542, %v543
  %v545 = vsel %vm369, %v483, 0.0
  %v546 = vadd.f32 %v544, %v545
  %v547 = vsel %vm369, %v485, 0.0
  %v548 = vadd.f32 %v546, %v547
  %v549 = vsel %vm369, %v487, 0.0
  %v550 = vadd.f32 %v548, %v549
  %v551 = vsel %vm369, %v489, 0.0
  %v552 = vadd.f32 %v550, %v551
  %v553 = vsel %vm369, %v491, 0.0
  %v554 = vadd.f32 %v552, %v553
  %v555 = vsel %vm369, %v493, 0.0
  %v556 = vadd.f32 %v554, %v555
  %v557 = vsel %vm369, %v495, 0.0
  %v558 = vadd.f32 %v556, %v557
  %v559 = vsel %vm369, %v497, 0.0
  %v560 = vadd.f32 %v558, %v559
  %v561 = vsel %vm369, %v499, 0.0
  %v562 = vadd.f32 %v560, %v561
  %v563 = vsel %vm369, %v501, 0.0
  %v564 = vadd.f32 %v562, %v563
  %v565 = vsel %vm369, %v503, 0.0
  %v566 = vadd.f32 %v564, %v565
  %v567 = vsel %vm369, %v505, 0.0
  %v568 = vadd.f32 %v566, %v567
  %v569 = vsel %vm369, %v507, 0.0
  %v570 = vadd.f32 %v568, %v569
  %v571 = vrot.slane %v570, 4
  %v572 = vadd.f32 %v570, %v571
  %v573 = vrot.slane %v572, 2
  %v574 = vadd.f32 %v572, %v573
  %v575 = vrot.slane %v574, 1
  %v576 = vadd.f32 %v574, %v575
  %v577 = vsel %vm369, %v509, 0.0
  %v578 = vsel %vm369, %v511, 0.0
  %v579 = vadd.f32 %v577, %v578
  %v580 = vsel %vm369, %v513, 0.0
  %v581 = vadd.f32 %v579, %v580
  %v582 = vsel %vm369, %v515, 0.0
  %v583 = vadd.f32 %v581, %v582
  %v584 = vsel %vm369, %v517, 0.0
  %v585 = vadd.f32 %v583, %v584
  %v586 = vsel %vm369, %v519, 0.0
  %v587 = vadd.f32 %v585, %v586
  %v588 = vsel %vm369, %v521, 0.0
  %v589 = vadd.f32 %v587, %v588
  %v590 = vsel %vm369, %v523, 0.0
  %v591 = vadd.f32 %v589, %v590
  %v592 = vsel %vm369, %v525, 0.0
  %v593 = vadd.f32 %v591, %v592
  %v594 = vsel %vm369, %v527, 0.0
  %v595 = vadd.f32 %v593, %v594
  %v596 = vsel %vm369, %v529, 0.0
  %v597 = vadd.f32 %v595, %v596
  %v598 = vsel %vm369, %v531, 0.0
  %v599 = vadd.f32 %v597, %v598
  %v600 = vsel %vm369, %v533, 0.0
  %v601 = vadd.f32 %v599, %v600
  %v602 = vsel %vm369, %v535, 0.0
  %v603 = vadd.f32 %v601, %v602
  %v604 = vsel %vm369, %v537, 0.0
  %v605 = vadd.f32 %v603, %v604
  %v606 = vsel %vm369, %v539, 0.0
  %v607 = vadd.f32 %v605, %v606
  %v608 = vrot.slane %v607, 4
  %v609 = vadd.f32 %v607, %v608
  %v610 = vrot.slane %v609, 2
  %v611 = vadd.f32 %v609, %v610
  %v612 = vrot.slane %v611, 1
  %v613 = vadd.f32 %v611, %v612
  %v614 = vrcp.pop %v576
  %v615 = vrcp.pop %v613
  %v616 = vmul.f32 %v477, %v614
  %v617 = vmul.f32 %v479, %v614
  %v618 = vmul.f32 %v481, %v614
  %v619 = vmul.f32 %v483, %v614
  %v620 = vmul.f32 %v485, %v614
  %v621 = vmul.f32 %v487, %v614
  %v622 = vmul.f32 %v489, %v614
  %v623 = vmul.f32 %v491, %v614
  %v624 = vmul.f32 %v493, %v614
  %v625 = vmul.f32 %v495, %v614
  %v626 = vmul.f32 %v497, %v614
  %v627 = vmul.f32 %v499, %v614
  %v628 = vmul.f32 %v501, %v614
  %v629 = vmul.f32 %v503, %v614
  %v630 = vmul.f32 %v505, %v614
  %v631 = vmul.f32 %v507, %v614
  %v632 = vmul.f32 %v509, %v615
  %v633 = vmul.f32 %v511, %v615
  %v634 = vmul.f32 %v513, %v615
  %v635 = vmul.f32 %v515, %v615
  %v636 = vmul.f32 %v517, %v615
  %v637 = vmul.f32 %v519, %v615
  %v638 = vmul.f32 %v521, %v615
  %v639 = vmul.f32 %v523, %v615
  %v640 = vmul.f32 %v525, %v615
  %v641 = vmul.f32 %v527, %v615
  %v642 = vmul.f32 %v529, %v615
  %v643 = vmul.f32 %v531, %v615
  %v644 = vmul.f32 %v533, %v615
  %v645 = vmul.f32 %v535, %v615
  %v646 = vmul.f32 %v537, %v615
  %v647 = vmul.f32 %v539, %v615
  %v648 = vsel %vm369, %v616, 0.0
  %649 = vadd.xlane.f32.xlu0 %v648
  %v650 = vpop.xlane.xlu0 %649
  %v651 = vsel %vm369, %v617, 0.0
  %652 = vadd.xlane.f32.xlu0 %v651
  %v653 = vpop.xlane.xlu0 %652
  %v654 = vsel %vm369, %v618, 0.0
  %655 = vadd.xlane.f32.xlu0 %v654
  %v656 = vpop.xlane.xlu0 %655
  %v657 = vsel %vm369, %v619, 0.0
  %658 = vadd.xlane.f32.xlu0 %v657
  %v659 = vpop.xlane.xlu0 %658
  %v660 = vsel %vm369, %v620, 0.0
  %661 = vadd.xlane.f32.xlu0 %v660
  %v662 = vpop.xlane.xlu0 %661
  %v663 = vsel %vm369, %v621, 0.0
  %664 = vadd.xlane.f32.xlu0 %v663
  %v665 = vpop.xlane.xlu0 %664
  %v666 = vsel %vm369, %v622, 0.0
  %667 = vadd.xlane.f32.xlu0 %v666
  %v668 = vpop.xlane.xlu0 %667
  %v669 = vsel %vm369, %v623, 0.0
  %670 = vadd.xlane.f32.xlu0 %v669
  %v671 = vpop.xlane.xlu0 %670
  %v672 = vsel %vm369, %v624, 0.0
  %673 = vadd.xlane.f32.xlu0 %v672
  %v674 = vpop.xlane.xlu0 %673
  %v675 = vsel %vm369, %v625, 0.0
  %676 = vadd.xlane.f32.xlu0 %v675
  %v677 = vpop.xlane.xlu0 %676
  %v678 = vsel %vm369, %v626, 0.0
  %679 = vadd.xlane.f32.xlu0 %v678
  %v680 = vpop.xlane.xlu0 %679
  %v681 = vsel %vm369, %v627, 0.0
  %682 = vadd.xlane.f32.xlu0 %v681
  %v683 = vpop.xlane.xlu0 %682
  %v684 = vsel %vm369, %v628, 0.0
  %685 = vadd.xlane.f32.xlu0 %v684
  %v686 = vpop.xlane.xlu0 %685
  %v687 = vsel %vm369, %v629, 0.0
  %688 = vadd.xlane.f32.xlu0 %v687
  %v689 = vpop.xlane.xlu0 %688
  %v690 = vsel %vm369, %v630, 0.0
  %691 = vadd.xlane.f32.xlu0 %v690
  %v692 = vpop.xlane.xlu0 %691
  %v693 = vsel %vm369, %v631, 0.0
  %694 = vadd.xlane.f32.xlu0 %v693
  %v695 = vpop.xlane.xlu0 %694
  %v696 = vsel %vm369, %v632, 0.0
  %697 = vadd.xlane.f32.xlu0 %v696
  %v698 = vpop.xlane.xlu0 %697
  %v699 = vsel %vm369, %v633, 0.0
  %700 = vadd.xlane.f32.xlu0 %v699
  %v701 = vpop.xlane.xlu0 %700
  %v702 = vsel %vm369, %v634, 0.0
  %703 = vadd.xlane.f32.xlu0 %v702
  %v704 = vpop.xlane.xlu0 %703
  %v705 = vsel %vm369, %v635, 0.0
  %706 = vadd.xlane.f32.xlu0 %v705
  %v707 = vpop.xlane.xlu0 %706
  %v708 = vsel %vm369, %v636, 0.0
  %709 = vadd.xlane.f32.xlu0 %v708
  %v710 = vpop.xlane.xlu0 %709
  %v711 = vsel %vm369, %v637, 0.0
  %712 = vadd.xlane.f32.xlu0 %v711
  %v713 = vpop.xlane.xlu0 %712
  %v714 = vsel %vm369, %v638, 0.0
  %715 = vadd.xlane.f32.xlu0 %v714
  %v716 = vpop.xlane.xlu0 %715
  %v717 = vsel %vm369, %v639, 0.0
  %718 = vadd.xlane.f32.xlu0 %v717
  %v719 = vpop.xlane.xlu0 %718
  %v720 = vsel %vm369, %v640, 0.0
  %721 = vadd.xlane.f32.xlu0 %v720
  %v722 = vpop.xlane.xlu0 %721
  %v723 = vsel %vm369, %v641, 0.0
  %724 = vadd.xlane.f32.xlu0 %v723
  %v725 = vpop.xlane.xlu0 %724
  %v726 = vsel %vm369, %v642, 0.0
  %727 = vadd.xlane.f32.xlu0 %v726
  %v728 = vpop.xlane.xlu0 %727
  %v729 = vsel %vm369, %v643, 0.0
  %730 = vadd.xlane.f32.xlu0 %v729
  %v731 = vpop.xlane.xlu0 %730
  %v732 = vsel %vm369, %v644, 0.0
  %733 = vadd.xlane.f32.xlu0 %v732
  %v734 = vpop.xlane.xlu0 %733
  %v735 = vsel %vm369, %v645, 0.0
  %736 = vadd.xlane.f32.xlu0 %v735
  %v737 = vpop.xlane.xlu0 %736
  %v738 = vsel %vm369, %v646, 0.0
  %739 = vadd.xlane.f32.xlu0 %v738
  %v740 = vpop.xlane.xlu0 %739
  %v741 = vsel %vm369, %v647, 0.0
  %742 = vadd.xlane.f32.xlu0 %v741
  %v743 = vpop.xlane.xlu0 %742
  %v744 = vpack.c.bf16 %v617, %v616
  %v745 = vpack.c.bf16 %v619, %v618
  %v746 = vpack.c.bf16 %v621, %v620
  %v747 = vpack.c.bf16 %v623, %v622
  %v748 = vpack.c.bf16 %v625, %v624
  %v749 = vpack.c.bf16 %v627, %v626
  %v750 = vpack.c.bf16 %v629, %v628
  %v751 = vpack.c.bf16 %v631, %v630
  %v752 = vpack.c.bf16 %v633, %v632
  %v753 = vpack.c.bf16 %v635, %v634
  %v754 = vpack.c.bf16 %v637, %v636
  %v755 = vpack.c.bf16 %v639, %v638
  %v756 = vpack.c.bf16 %v641, %v640
  %v757 = vpack.c.bf16 %v643, %v642
  %v758 = vpack.c.bf16 %v645, %v644
  %v759 = vpack.c.bf16 %v647, %v646
  %v760 = vld [vmem:[%s2] sm:$0xf]
  %v761 = vld [vmem:[%s2 + $0x4] sm:$0xf]
  %v762 = vld [vmem:[%s2 + $0x8] sm:$0xf]
  %v763 = vld [vmem:[%s2 + $0xc] sm:$0xf]
  %v764 = vld [vmem:[%s2 + $0x10] sm:$0xf]
  %v765 = vld [vmem:[%s2 + $0x14] sm:$0xf]
  %v766 = vld [vmem:[%s2 + $0x18] sm:$0xf]
  %v767 = vld [vmem:[%s2 + $0x1c] sm:$0x7]
  %v776 = vunpack.c.l.b16 %v760
  %v777 = vunpack.c.l.b16 %v761
  %v778 = vunpack.c.l.b16 %v762
  %v779 = vunpack.c.l.b16 %v763
  %v780 = vunpack.c.l.b16 %v764
  %v781 = vunpack.c.l.b16 %v765
  %v782 = vunpack.c.l.b16 %v766
  %v783 = vunpack.c.l.b16 %v767
  %v784 = vpack.c.b16 %v777, %v776
  %v785 = vpack.c.b16 %v779, %v778
  %v786 = vpack.c.b16 %v781, %v780
  %v787 = vpack.c.b16 %v783, %v782
  %v792 = vsel %vm369, %v744, 0
  %v795 = vsel %vm369, %v745, 0
  %v798 = vsel %vm369, %v746, 0
  %v801 = vsel %vm369, %v747, 0
  %v804 = vsel %vm369, %v748, 0
  %v807 = vsel %vm369, %v749, 0
  %v810 = vsel %vm369, %v750, 0
  %v813 = vsel %vm369, %v751, 0
  %v816 = vsel %vm369, %v752, 0
  %v819 = vsel %vm369, %v753, 0
  %v822 = vsel %vm369, %v754, 0
  %v825 = vsel %vm369, %v755, 0
  %v828 = vsel %vm369, %v756, 0
  %v831 = vsel %vm369, %v757, 0
  %v834 = vsel %vm369, %v758, 0
  %v837 = vsel %vm369, %v759, 0
  %vm839 = vcmask 1046528
  %v841 = vsel %vm839, %v787, 0
  %843 = vmatprep.subr.bf16.mxu0 0
  %844 = vmatpush1.bf16.msra.mxu0 %v784
  %845 = vmatprep.subr.bf16.mxu0 0
  %846 = vmatpush1.bf16.msra.mxu0 %v785
  %847 = vmatprep.subr.bf16.mxu0 0
  %848 = vmatpush1.bf16.msra.mxu0 %v786
  %849 = vmatprep.subr.bf16.mxu0 0
  %850 = vmatpush1.bf16.msra.mxu0 %v841
  %851 = vmatprep.subr.bf16.mxu0 0
  %852 = vmatpush1.bf16.msra.mxu0 0
  %853 = vmatprep.subr.bf16.mxu0 0
  %854 = vmatpush1.bf16.msra.mxu0 0
  %855 = vmatprep.subr.bf16.mxu0 0
  %856 = vmatpush1.bf16.msra.mxu0 0
  %857 = vmatprep.subr.bf16.mxu0 0
  %858 = vmatpush1.bf16.msra.mxu0 0
  %859 = vmatprep.subr.bf16.mxu0 0
  %860 = vmatpush1.bf16.msra.mxu0 0
  %861 = vmatprep.subr.bf16.mxu0 0
  %862 = vmatpush1.bf16.msra.mxu0 0
  %863 = vmatprep.subr.bf16.mxu0 0
  %864 = vmatpush1.bf16.msra.mxu0 0
  %865 = vmatprep.subr.bf16.mxu0 0
  %866 = vmatpush1.bf16.msra.mxu0 0
  %867 = vmatprep.subr.bf16.mxu0 0
  %868 = vmatpush1.bf16.msra.mxu0 0
  %869 = vmatprep.subr.bf16.mxu0 0
  %870 = vmatpush1.bf16.msra.mxu0 0
  %871 = vmatprep.subr.bf16.mxu0 0
  %872 = vmatpush1.bf16.msra.mxu0 0
  %873 = vmatprep.subr.bf16.mxu0 0
  %874 = vmatpush1.bf16.msra.mxu0 0
  %875 = vmatprep.mubr.bf16.mxu0 0
  %876 = vmatmul.mubr.bf16.gmra.mrb[0].mxu0 %v792
  %v877 = vpop.f32.mrb[0].mxu0
  %v878 = vadd.f32 0.0, %v877
  %v879 = vpop.f32.mrb[0].mxu0
  %v880 = vpop.f32.mrb[0].mxu0
  %v881 = vadd.f32 0.0, %v880
  %v882 = vpop.f32.mrb[0].mxu0
  %883 = vmatprep.mubr.bf16.mxu0 0
  %884 = vmatmul.mubr.bf16.gmra.mrb[0].mxu0 %v795
  %v885 = vpop.f32.mrb[0].mxu0
  %v886 = vadd.f32 0.0, %v885
  %v887 = vpop.f32.mrb[0].mxu0
  %v888 = vpop.f32.mrb[0].mxu0
  %v889 = vadd.f32 0.0, %v888
  %v890 = vpop.f32.mrb[0].mxu0
  %891 = vmatprep.mubr.bf16.mxu0 0
  %892 = vmatmul.mubr.bf16.gmra.mrb[0].mxu0 %v798
  %v893 = vpop.f32.mrb[0].mxu0
  %v894 = vadd.f32 0.0, %v893
  %v895 = vpop.f32.mrb[0].mxu0
  %v896 = vpop.f32.mrb[0].mxu0
  %v897 = vadd.f32 0.0, %v896
  %v898 = vpop.f32.mrb[0].mxu0
  %899 = vmatprep.mubr.bf16.mxu0 0
  %900 = vmatmul.mubr.bf16.gmra.mrb[0].mxu0 %v801
  %v901 = vpop.f32.mrb[0].mxu0
  %v902 = vadd.f32 0.0, %v901
  %v903 = vpop.f32.mrb[0].mxu0
  %v904 = vpop.f32.mrb[0].mxu0
  %v905 = vadd.f32 0.0, %v904
  %v906 = vpop.f32.mrb[0].mxu0
  %907 = vmatprep.mubr.bf16.mxu0 0
  %908 = vmatmul.mubr.bf16.gmra.mrb[0].mxu0 %v804
  %v909 = vpop.f32.mrb[0].mxu0
  %v910 = vadd.f32 0.0, %v909
  %v911 = vpop.f32.mrb[0].mxu0
  %v912 = vpop.f32.mrb[0].mxu0
  %v913 = vadd.f32 0.0, %v912
  %v914 = vpop.f32.mrb[0].mxu0
  %915 = vmatprep.mubr.bf16.mxu0 0
  %916 = vmatmul.mubr.bf16.gmra.mrb[0].mxu0 %v807
  %v917 = vpop.f32.mrb[0].mxu0
  %v918 = vadd.f32 0.0, %v917
  %v919 = vpop.f32.mrb[0].mxu0
  %v920 = vpop.f32.mrb[0].mxu0
  %v921 = vadd.f32 0.0, %v920
  %v922 = vpop.f32.mrb[0].mxu0
  %923 = vmatprep.mubr.bf16.mxu0 0
  %924 = vmatmul.mubr.bf16.gmra.mrb[0].mxu0 %v810
  %v925 = vpop.f32.mrb[0].mxu0
  %v926 = vadd.f32 0.0, %v925
  %v927 = vpop.f32.mrb[0].mxu0
  %v928 = vpop.f32.mrb[0].mxu0
  %v929 = vadd.f32 0.0, %v928
  %v930 = vpop.f32.mrb[0].mxu0
  %931 = vmatprep.mubr.bf16.mxu0 0
  %932 = vmatmul.mubr.bf16.gmra.mrb[0].mxu0 %v813
  %v933 = vpop.f32.mrb[0].mxu0
  %v934 = vadd.f32 0.0, %v933
  %v935 = vpop.f32.mrb[0].mxu0
  %v936 = vpop.f32.mrb[0].mxu0
  %v937 = vadd.f32 0.0, %v936
  %v938 = vpop.f32.mrb[0].mxu0
  %939 = vmatprep.mubr.bf16.mxu0 0
  %940 = vmatmul.mubr.bf16.gmra.mrb[0].mxu0 %v816
  %v941 = vpop.f32.mrb[0].mxu0
  %v942 = vadd.f32 0.0, %v941
  %v943 = vpop.f32.mrb[0].mxu0
  %v944 = vpop.f32.mrb[0].mxu0
  %v945 = vadd.f32 0.0, %v944
  %v946 = vpop.f32.mrb[0].mxu0
  %947 = vmatprep.mubr.bf16.mxu0 0
  %948 = vmatmul.mubr.bf16.gmra.mrb[0].mxu0 %v819
  %v949 = vpop.f32.mrb[0].mxu0
  %v950 = vadd.f32 0.0, %v949
  %v951 = vpop.f32.mrb[0].mxu0
  %v952 = vpop.f32.mrb[0].mxu0
  %v953 = vadd.f32 0.0, %v952
  %v954 = vpop.f32.mrb[0].mxu0
  %955 = vmatprep.mubr.bf16.mxu0 0
  %956 = vmatmul.mubr.bf16.gmra.mrb[0].mxu0 %v822
  %v957 = vpop.f32.mrb[0].mxu0
  %v958 = vadd.f32 0.0, %v957
  %v959 = vpop.f32.mrb[0].mxu0
  %v960 = vpop.f32.mrb[0].mxu0
  %v961 = vadd.f32 0.0, %v960
  %v962 = vpop.f32.mrb[0].mxu0
  %963 = vmatprep.mubr.bf16.mxu0 0
  %964 = vmatmul.mubr.bf16.gmra.mrb[0].mxu0 %v825
  %v965 = vpop.f32.mrb[0].mxu0
  %v966 = vadd.f32 0.0, %v965
  %v967 = vpop.f32.mrb[0].mxu0
  %v968 = vpop.f32.mrb[0].mxu0
  %v969 = vadd.f32 0.0, %v968
  %v970 = vpop.f32.mrb[0].mxu0
  %971 = vmatprep.mubr.bf16.mxu0 0
  %972 = vmatmul.mubr.bf16.gmra.mrb[0].mxu0 %v828
  %v973 = vpop.f32.mrb[0].mxu0
  %v974 = vadd.f32 0.0, %v973
  %v975 = vpop.f32.mrb[0].mxu0
  %v976 = vpop.f32.mrb[0].mxu0
  %v977 = vadd.f32 0.0, %v976
  %v978 = vpop.f32.mrb[0].mxu0
  %979 = vmatprep.mubr.bf16.mxu0 0
  %980 = vmatmul.mubr.bf16.gmra.mrb[0].mxu0 %v831
  %v981 = vpop.f32.mrb[0].mxu0
  %v982 = vadd.f32 0.0, %v981
  %v983 = vpop.f32.mrb[0].mxu0
  %v984 = vpop.f32.mrb[0].mxu0
  %v985 = vadd.f32 0.0, %v984
  %v986 = vpop.f32.mrb[0].mxu0
  %987 = vmatprep.mubr.bf16.mxu0 0
  %988 = vmatmul.mubr.bf16.gmra.mrb[0].mxu0 %v834
  %v989 = vpop.f32.mrb[0].mxu0
  %v990 = vadd.f32 0.0, %v989
  %v991 = vpop.f32.mrb[0].mxu0
  %v992 = vpop.f32.mrb[0].mxu0
  %v993 = vadd.f32 0.0, %v992
  %v994 = vpop.f32.mrb[0].mxu0
  %995 = vmatprep.mubr.bf16.mxu0 0
  %996 = vmatmul.mubr.bf16.gmra.mrb[0].mxu0 %v837
  %v997 = vpop.f32.mrb[0].mxu0
  %v998 = vadd.f32 0.0, %v997
  %v999 = vpop.f32.mrb[0].mxu0
  %v1000 = vpop.f32.mrb[0].mxu0
  %v1001 = vadd.f32 0.0, %v1000
  %v1002 = vpop.f32.mrb[0].mxu0
  %1003 = vdwg.mxu0
  %v1004 = vrcp.pop %v650
  %v1005 = vmul.f32 %v878, %v1004
  %v1006 = vrcp.pop %v653
  %v1007 = vmul.f32 %v881, %v1006
  %v1008 = vrcp.pop %v656
  %v1009 = vmul.f32 %v886, %v1008
  %v1010 = vrcp.pop %v659
  %v1011 = vmul.f32 %v889, %v1010
  %v1012 = vrcp.pop %v662
  %v1013 = vmul.f32 %v894, %v1012
  %v1014 = vrcp.pop %v665
  %v1015 = vmul.f32 %v897, %v1014
  %v1016 = vrcp.pop %v668
  %v1017 = vmul.f32 %v902, %v1016
  %v1018 = vrcp.pop %v671
  %v1019 = vmul.f32 %v905, %v1018
  %v1020 = vrcp.pop %v674
  %v1021 = vmul.f32 %v910, %v1020
  %v1022 = vrcp.pop %v677
  %v1023 = vmul.f32 %v913, %v1022
  %v1024 = vrcp.pop %v680
  %v1025 = vmul.f32 %v918, %v1024
  %v1026 = vrcp.pop %v683
  %v1027 = vmul.f32 %v921, %v1026
  %v1028 = vrcp.pop %v686
  %v1029 = vmul.f32 %v926, %v1028
  %v1030 = vrcp.pop %v689
  %v1031 = vmul.f32 %v929, %v1030
  %v1032 = vrcp.pop %v692
  %v1033 = vmul.f32 %v934, %v1032
  %v1034 = vrcp.pop %v695
  %v1035 = vmul.f32 %v937, %v1034
  %v1036 = vrcp.pop %v698
  %v1037 = vmul.f32 %v942, %v1036
  %v1038 = vrcp.pop %v701
  %v1039 = vmul.f32 %v945, %v1038
  %v1040 = vrcp.pop %v704
  %v1041 = vmul.f32 %v950, %v1040
  %v1042 = vrcp.pop %v707
  %v1043 = vmul.f32 %v953, %v1042
  %v1044 = vrcp.pop %v710
  %v1045 = vmul.f32 %v958, %v1044
  %v1046 = vrcp.pop %v713
  %v1047 = vmul.f32 %v961, %v1046
  %v1048 = vrcp.pop %v716
  %v1049 = vmul.f32 %v966, %v1048
  %v1050 = vrcp.pop %v719
  %v1051 = vmul.f32 %v969, %v1050
  %v1052 = vrcp.pop %v722
  %v1053 = vmul.f32 %v974, %v1052
  %v1054 = vrcp.pop %v725
  %v1055 = vmul.f32 %v977, %v1054
  %v1056 = vrcp.pop %v728
  %v1057 = vmul.f32 %v982, %v1056
  %v1058 = vrcp.pop %v731
  %v1059 = vmul.f32 %v985, %v1058
  %v1060 = vrcp.pop %v734
  %v1061 = vmul.f32 %v990, %v1060
  %v1062 = vrcp.pop %v737
  %v1063 = vmul.f32 %v993, %v1062
  %v1064 = vrcp.pop %v740
  %v1065 = vmul.f32 %v998, %v1064
  %v1066 = vrcp.pop %v743
  %v1067 = vmul.f32 %v1001, %v1066
  %1068 = vst.msk [vmem:[%s3] sm:$0xff] %vm159, %v1005
  %1069 = vst.msk [vmem:[%s3 + $0x8] sm:$0xff] %vm159, %v1007
  %1070 = vst.msk [vmem:[%s3 + $0x10] sm:$0xff] %vm159, %v1009
  %1071 = vst.msk [vmem:[%s3 + $0x18] sm:$0xff] %vm159, %v1011
  %1072 = vst.msk [vmem:[%s3 + $0x20] sm:$0xff] %vm159, %v1013
  %1073 = vst.msk [vmem:[%s3 + $0x28] sm:$0xff] %vm159, %v1015
  %1074 = vst.msk [vmem:[%s3 + $0x30] sm:$0xff] %vm159, %v1017
  %1075 = vst.msk [vmem:[%s3 + $0x38] sm:$0xff] %vm159, %v1019
  %1076 = vst.msk [vmem:[%s3 + $0x40] sm:$0xff] %vm159, %v1021
  %1077 = vst.msk [vmem:[%s3 + $0x48] sm:$0xff] %vm159, %v1023
  %1078 = vst.msk [vmem:[%s3 + $0x50] sm:$0xff] %vm159, %v1025
  %1079 = vst.msk [vmem:[%s3 + $0x58] sm:$0xff] %vm159, %v1027
  %1080 = vst.msk [vmem:[%s3 + $0x60] sm:$0xff] %vm159, %v1029
  %1081 = vst.msk [vmem:[%s3 + $0x68] sm:$0xff] %vm159, %v1031
  %1082 = vst.msk [vmem:[%s3 + $0x70] sm:$0xff] %vm159, %v1033
  %1083 = vst.msk [vmem:[%s3 + $0x78] sm:$0xff] %vm159, %v1035
  %1084 = vst.msk [vmem:[%s3 + $0x80] sm:$0xff] %vm159, %v1037
  %1085 = vst.msk [vmem:[%s3 + $0x88] sm:$0xff] %vm159, %v1039
  %1086 = vst.msk [vmem:[%s3 + $0x90] sm:$0xff] %vm159, %v1041
  %1087 = vst.msk [vmem:[%s3 + $0x98] sm:$0xff] %vm159, %v1043
  %1088 = vst.msk [vmem:[%s3 + $0xa0] sm:$0xff] %vm159, %v1045
  %1089 = vst.msk [vmem:[%s3 + $0xa8] sm:$0xff] %vm159, %v1047
  %1090 = vst.msk [vmem:[%s3 + $0xb0] sm:$0xff] %vm159, %v1049
  %1091 = vst.msk [vmem:[%s3 + $0xb8] sm:$0xff] %vm159, %v1051
  %1092 = vst.msk [vmem:[%s3 + $0xc0] sm:$0xff] %vm159, %v1053
  %1093 = vst.msk [vmem:[%s3 + $0xc8] sm:$0xff] %vm159, %v1055
  %1094 = vst.msk [vmem:[%s3 + $0xd0] sm:$0xff] %vm159, %v1057
  %1095 = vst.msk [vmem:[%s3 + $0xd8] sm:$0xff] %vm159, %v1059
  %1096 = vst.msk [vmem:[%s3 + $0xe0] sm:$0xff] %vm159, %v1061
  %1097 = vst.msk [vmem:[%s3 + $0xe8] sm:$0xff] %vm159, %v1063
  %1098 = vst.msk [vmem:[%s3 + $0xf0] sm:$0xff] %vm159, %v1065
  %1099 = vst.msk [vmem:[%s3 + $0xf8] sm:$0xff] %vm159, %v1067
  // Predicated region
  $region14: #{external_attention_forward.1} parent=0 // pred_check
    _
  $region15: #{external_attention_forward.1} parent=0 // pred_check_branch
    %1101 = sbr.rel (0) target = $region17
  $region16: #{external_attention_forward.1} parent=0 // pred_region
    _
  $region17: #{external_attention_forward.1} parent=0 // pred_fallthru
    _
  // Predicated region
  $region18: #{external_attention_forward.1} parent=0 // pred_check
    _
  $region19: #{external_attention_forward.1} parent=0 // pred_check_branch
    %1103 = sbr.rel (0) target = $region21
  $region20: #{external_attention_forward.1} parent=0 // pred_region
    _
  $region21: #{external_attention_forward.1} parent=0 // pred_fallthru
    _

</llo_original>
